<compile_context>
chip_gen: v5e
topology: v5e:2x2
jax: 0.10.0
libtpu: 0.0.40
codegen_flags: <defaults>
</compile_context>

<pallas_src>
import jax
import jax.numpy as jnp
from jax.experimental import pallas as pl
from jax.experimental.pallas import tpu as pltpu

# ----------------------------- model config -----------------------------
B = 2            # batch
C = 64           # channels
H = 16           # spatial height
W = 16           # spatial width
REDUCTION = 16
C_RED = C // REDUCTION      # bottleneck width = 4


# ----------------------------- Pallas kernel -----------------------------
def channel_attention_kernel(x_ref, w1_ref, w2_ref, o_ref):
    # x_ref/o_ref: (Bblk, C, H*W)   w1_ref: (C_RED, C)   w2_ref: (C, C_RED)
    # (weights are in PyTorch Linear (out, in) layout -> column-form MLP)
    nb = x_ref.shape[0]
    inv_hw = 1.0 / x_ref.shape[-1]
    w1 = w1_ref[...]
    w2 = w2_ref[...]

    for b in range(nb):  # static, tiny (1 or 2)
        xb = x_ref[b]                                            # (C, HW) C on sublanes
        # Global average / max pool over the spatial (lane) axis, kept as columns.
        avg = jnp.sum(xb, axis=-1, keepdims=True) * inv_hw      # (C, 1)
        mx = jnp.max(xb, axis=-1, keepdims=True)                 # (C, 1)
        pooled = jnp.concatenate([avg, mx], axis=-1)             # (C, 2)

        # fc1 for BOTH pooled columns in one matmul, then ReLU.
        h = jnp.maximum(
            jnp.dot(w1, pooled, preferred_element_type=jnp.float32), 0.0
        )                                                        # (C_RED, 2)
        # Sum the two branches, then one fc2 dot (exact: fc2 is bias-free).
        h_sum = h[:, 0:1] + h[:, 1:2]                            # (C_RED, 1)
        logits = jnp.dot(w2, h_sum, preferred_element_type=jnp.float32)  # (C, 1)
        attn = jax.nn.sigmoid(logits)                            # (C, 1) column

        # Re-read x for the rescale (short live range); lane-dense store.
        o_ref[b] = (x_ref[b] * attn).astype(o_ref.dtype)


# ----------------------------- wrapper -----------------------------
def _has_multiple_tensorcores():
    """True on chips with 2 TensorCores (v7x); False otherwise / on failure."""
    try:
        kind = jax.devices()[0].device_kind.lower()
    except Exception:
        return False
    return "v7" in kind


def channel_attention(x, w1, w2, *, force_batch_grid=None):
    """x: (B, C, H, W) f32.  w1: (C//r, C), w2: (C, C//r) -- PyTorch (out, in) layout."""
    b, c, h, w = x.shape
    hw = h * w
    c_red = w1.shape[0]
    x3 = x.reshape(b, c, hw)                     # spatial axis lane-dense (HW = 256)

    flops = (3 * b * c * hw                      # avg-sum, max-compare, rescale passes
             + 2 * b * c * c_red * 2             # fc1 on both pooled columns
             + 2 * b * c_red * c)                # fc2
    bytes_accessed = (2 * x3.size + w1.size + w2.size) * x.dtype.itemsize
    cost = pl.CostEstimate(flops=flops, transcendentals=b * c,
                           bytes_accessed=bytes_accessed)

    use_grid = (_has_multiple_tensorcores()
                if force_batch_grid is None else force_batch_grid)

    if use_grid:
        # Per-batch blocks, parallel grid -> both TensorCores on v7x.
        out3 = pl.pallas_call(
            channel_attention_kernel,
            out_shape=jax.ShapeDtypeStruct((b, c, hw), x.dtype),
            grid=(b,),
            in_specs=[
                pl.BlockSpec((1, c, hw), lambda i: (i, 0, 0)),
                pl.BlockSpec((c_red, c), lambda i: (0, 0)),
                pl.BlockSpec((c, c_red), lambda i: (0, 0)),
            ],
            out_specs=pl.BlockSpec((1, c, hw), lambda i: (i, 0, 0)),
            compiler_params=pltpu.CompilerParams(
                dimension_semantics=("parallel",)),
            cost_estimate=cost,
        )(x3, w1, w2)
    else:
        # Gridless: whole (B, C, HW) tensor (128 KiB) resident in VMEM, one shot.
        vmem = pl.BlockSpec(memory_space=pltpu.MemorySpace.VMEM)
        out3 = pl.pallas_call(
            channel_attention_kernel,
            out_shape=jax.ShapeDtypeStruct((b, c, hw), x.dtype),
            in_specs=[vmem, vmem, vmem],
            out_specs=vmem,
            cost_estimate=cost,
        )(x3, w1, w2)

    return out3.reshape(b, c, h, w)


# ----------------------------- pure-JAX reference -----------------------------
def reference(x, w1, w2):
    # w1: (C//r, C), w2: (C, C//r)  (PyTorch Linear (out, in) layout)
    avg = jnp.mean(x, axis=(2, 3))                # (B, C)
    mx = jnp.max(x, axis=(2, 3))                  # (B, C)

    def fc(t):
        return jnp.maximum(t @ w1.T, 0.0) @ w2.T

    weights = jax.nn.sigmoid(fc(avg) + fc(mx))    # (B, C)
    return x * weights[:, :, None, None]


# ----------------------------- main -----------------------------
if __name__ == "__main__":
    key = jax.random.PRNGKey(0)
    kx, k1, k2 = jax.random.split(key, 3)

    x = jax.random.normal(kx, (B, C, H, W), dtype=jnp.float32)
    # PyTorch Linear stores weight as (out, in); kernel consumes that layout directly.
    w1 = jax.random.normal(k1, (C_RED, C), dtype=jnp.float32) * 0.1   # fc1 weight
    w2 = jax.random.normal(k2, (C, C_RED), dtype=jnp.float32) * 0.1   # fc2 weight

    ref = reference(x, w1, w2)

    # Exercise BOTH code paths (gridless 1-TC form and batch-parallel grid form)
    # so the kernel is verified regardless of which path the device auto-selects.
    for grid_mode in (False, True):
        out = jax.block_until_ready(
            channel_attention(x, w1, w2, force_batch_grid=grid_mode))
        assert out.shape == (B, C, H, W)
        assert jnp.allclose(out, ref, atol=1e-4, rtol=1e-4), (
            f"mismatch vs pure-JAX reference (grid_mode={grid_mode})")

    # Auto path (device-dependent selection).
    out = jax.block_until_ready(channel_attention(x, w1, w2))
    assert jnp.allclose(out, ref, atol=1e-4, rtol=1e-4), "mismatch (auto path)"

    print("KERNEL_OK")
</pallas_src>

<mosaic_0001>
module attributes {stable_mosaic.version = 11 : i64} {
  func.func @channel_attention_kernel(%arg0: memref<2x64x256xf32, #tpu.memory_space<vmem>>, %arg1: memref<4x64xf32, #tpu.memory_space<vmem>>, %arg2: memref<64x4xf32, #tpu.memory_space<vmem>>, %arg3: memref<2x64x256xf32, #tpu.memory_space<vmem>>) attributes {dimension_semantics = [], scalar_prefetch = 0 : i64, scratch_operands = 0 : i64, tpu.core_type = #tpu.core_type<tc>} {
    %c0 = arith.constant 0 : index
    %c0_0 = arith.constant 0 : index
    %0 = vector.load %arg1[%c0, %c0_0] : memref<4x64xf32, #tpu.memory_space<vmem>>, vector<4x64xf32>
    %c0_1 = arith.constant 0 : index
    %c0_2 = arith.constant 0 : index
    %1 = vector.load %arg2[%c0_1, %c0_2] : memref<64x4xf32, #tpu.memory_space<vmem>>, vector<64x4xf32>
    %c0_3 = arith.constant 0 : index
    %c0_4 = arith.constant 0 : index
    %c0_5 = arith.constant 0 : index
    %2 = vector.load %arg0[%c0_3, %c0_4, %c0_5] : memref<2x64x256xf32, #tpu.memory_space<vmem>>, vector<1x64x256xf32>
    %3 = vector.shape_cast %2 : vector<1x64x256xf32> to vector<64x256xf32>
    %cst = arith.constant dense<0.000000e+00> : vector<64xf32>
    %4 = vector.multi_reduction <add>, %3, %cst [1] : vector<64x256xf32> to vector<64xf32>
    %5 = vector.shape_cast %4 : vector<64xf32> to vector<64x1xf32>
    %cst_6 = arith.constant 3.906250e-03 : f32
    %6 = vector.broadcast %cst_6 : f32 to vector<64x1xf32>
    %7 = arith.mulf %5, %6 : vector<64x1xf32>
    %cst_7 = arith.constant dense<0xFF800000> : vector<64xf32>
    %8 = vector.multi_reduction <maximumf>, %3, %cst_7 [1] : vector<64x256xf32> to vector<64xf32>
    %9 = vector.shape_cast %8 : vector<64xf32> to vector<64x1xf32>
    %10 = tpu.concatenate %7, %9 in 1 : vector<64x1xf32>, vector<64x1xf32> -> vector<64x2xf32>
    %cst_8 = arith.constant dense<0.000000e+00> : vector<4x2xf32>
    %11 = tpu.matmul %0, %10, %cst_8 {dimension_numbers = #tpu.dot_dimension_numbers<[1], [0], [0], [1], [0, 0, 1, 1], [], []>} : vector<4x64xf32>, vector<64x2xf32>, vector<4x2xf32> -> vector<4x2xf32>
    %cst_9 = arith.constant 0.000000e+00 : f32
    %12 = vector.broadcast %cst_9 : f32 to vector<4x2xf32>
    %13 = arith.maximumf %11, %12 : vector<4x2xf32>
    %14 = vector.extract_strided_slice %13 {offsets = [0, 0], sizes = [4, 1], strides = [1, 1]} : vector<4x2xf32> to vector<4x1xf32>
    %15 = vector.extract_strided_slice %13 {offsets = [0, 1], sizes = [4, 1], strides = [1, 1]} : vector<4x2xf32> to vector<4x1xf32>
    %16 = arith.addf %14, %15 : vector<4x1xf32>
    %cst_10 = arith.constant dense<0.000000e+00> : vector<64x1xf32>
    %17 = tpu.matmul %1, %16, %cst_10 {dimension_numbers = #tpu.dot_dimension_numbers<[1], [0], [0], [1], [0, 0, 1, 1], [], []>} : vector<64x4xf32>, vector<4x1xf32>, vector<64x1xf32> -> vector<64x1xf32>
    %18 = arith.negf %17 : vector<64x1xf32>
    %19 = math.exp %18 : vector<64x1xf32>
    %cst_11 = arith.constant 1.000000e+00 : f32
    %20 = vector.broadcast %cst_11 : f32 to vector<64x1xf32>
    %21 = arith.addf %20, %19 : vector<64x1xf32>
    %22 = arith.divf %20, %21 : vector<64x1xf32>
    %c0_12 = arith.constant 0 : index
    %c0_13 = arith.constant 0 : index
    %c0_14 = arith.constant 0 : index
    %23 = vector.load %arg0[%c0_12, %c0_13, %c0_14] : memref<2x64x256xf32, #tpu.memory_space<vmem>>, vector<1x64x256xf32>
    %24 = vector.shape_cast %23 : vector<1x64x256xf32> to vector<64x256xf32>
    %25 = vector.broadcast %22 : vector<64x1xf32> to vector<64x256xf32>
    %26 = arith.mulf %24, %25 : vector<64x256xf32>
    %c0_15 = arith.constant 0 : index
    %c0_16 = arith.constant 0 : index
    %c0_17 = arith.constant 0 : index
    %27 = vector.load %arg3[%c0_15, %c0_16, %c0_17] : memref<2x64x256xf32, #tpu.memory_space<vmem>>, vector<1x64x256xf32>
    %28 = vector.shape_cast %27 : vector<1x64x256xf32> to vector<64x256xf32>
    %29 = vector.shape_cast %26 : vector<64x256xf32> to vector<1x64x256xf32>
    tpu.vector_store %arg3[%c0_15, %c0_16, %c0_17], %29 {strides = array<i32>} : memref<2x64x256xf32, #tpu.memory_space<vmem>>, vector<1x64x256xf32>,
    %c1 = arith.constant 1 : index
    %c0_18 = arith.constant 0 : index
    %c0_19 = arith.constant 0 : index
    %30 = vector.load %arg0[%c1, %c0_18, %c0_19] : memref<2x64x256xf32, #tpu.memory_space<vmem>>, vector<1x64x256xf32>
    %31 = vector.shape_cast %30 : vector<1x64x256xf32> to vector<64x256xf32>
    %cst_20 = arith.constant dense<0.000000e+00> : vector<64xf32>
    %32 = vector.multi_reduction <add>, %31, %cst_20 [1] : vector<64x256xf32> to vector<64xf32>
    %33 = vector.shape_cast %32 : vector<64xf32> to vector<64x1xf32>
    %cst_21 = arith.constant 3.906250e-03 : f32
    %34 = vector.broadcast %cst_21 : f32 to vector<64x1xf32>
    %35 = arith.mulf %33, %34 : vector<64x1xf32>
    %cst_22 = arith.constant dense<0xFF800000> : vector<64xf32>
    %36 = vector.multi_reduction <maximumf>, %31, %cst_22 [1] : vector<64x256xf32> to vector<64xf32>
    %37 = vector.shape_cast %36 : vector<64xf32> to vector<64x1xf32>
    %38 = tpu.concatenate %35, %37 in 1 : vector<64x1xf32>, vector<64x1xf32> -> vector<64x2xf32>
    %cst_23 = arith.constant dense<0.000000e+00> : vector<4x2xf32>
    %39 = tpu.matmul %0, %38, %cst_23 {dimension_numbers = #tpu.dot_dimension_numbers<[1], [0], [0], [1], [0, 0, 1, 1], [], []>} : vector<4x64xf32>, vector<64x2xf32>, vector<4x2xf32> -> vector<4x2xf32>
    %cst_24 = arith.constant 0.000000e+00 : f32
    %40 = vector.broadcast %cst_24 : f32 to vector<4x2xf32>
    %41 = arith.maximumf %39, %40 : vector<4x2xf32>
    %42 = vector.extract_strided_slice %41 {offsets = [0, 0], sizes = [4, 1], strides = [1, 1]} : vector<4x2xf32> to vector<4x1xf32>
    %43 = vector.extract_strided_slice %41 {offsets = [0, 1], sizes = [4, 1], strides = [1, 1]} : vector<4x2xf32> to vector<4x1xf32>
    %44 = arith.addf %42, %43 : vector<4x1xf32>
    %cst_25 = arith.constant dense<0.000000e+00> : vector<64x1xf32>
    %45 = tpu.matmul %1, %44, %cst_25 {dimension_numbers = #tpu.dot_dimension_numbers<[1], [0], [0], [1], [0, 0, 1, 1], [], []>} : vector<64x4xf32>, vector<4x1xf32>, vector<64x1xf32> -> vector<64x1xf32>
    %46 = arith.negf %45 : vector<64x1xf32>
    %47 = math.exp %46 : vector<64x1xf32>
    %cst_26 = arith.constant 1.000000e+00 : f32
    %48 = vector.broadcast %cst_26 : f32 to vector<64x1xf32>
    %49 = arith.addf %48, %47 : vector<64x1xf32>
    %50 = arith.divf %48, %49 : vector<64x1xf32>
    %c1_27 = arith.constant 1 : index
    %c0_28 = arith.constant 0 : index
    %c0_29 = arith.constant 0 : index
    %51 = vector.load %arg0[%c1_27, %c0_28, %c0_29] : memref<2x64x256xf32, #tpu.memory_space<vmem>>, vector<1x64x256xf32>
    %52 = vector.shape_cast %51 : vector<1x64x256xf32> to vector<64x256xf32>
    %53 = vector.broadcast %50 : vector<64x1xf32> to vector<64x256xf32>
    %54 = arith.mulf %52, %53 : vector<64x256xf32>
    %c1_30 = arith.constant 1 : index
    %c0_31 = arith.constant 0 : index
    %c0_32 = arith.constant 0 : index
    %55 = vector.load %arg3[%c1_30, %c0_31, %c0_32] : memref<2x64x256xf32, #tpu.memory_space<vmem>>, vector<1x64x256xf32>
    %56 = vector.shape_cast %55 : vector<1x64x256xf32> to vector<64x256xf32>
    %57 = vector.shape_cast %54 : vector<64x256xf32> to vector<1x64x256xf32>
    tpu.vector_store %arg3[%c1_30, %c0_31, %c0_32], %57 {strides = array<i32>} : memref<2x64x256xf32, #tpu.memory_space<vmem>>, vector<1x64x256xf32>,
    return
  }
}

</mosaic_0001>

<llo_original>
// kernel: tpu_custom_call.1
$region0: #{tpu_custom_call.1}
  #allocation0 [shape = 'u32[]', space=smem, size = 0x4, offset = 0x4, fixed_abs, tag = 'smem constant byte address 0x4 - core index']
  #allocation1 [shape = 'u32[72,128]{1,0:T(1,128)}', space=vmem, size = 0x9000, scoped, tag = 'internal scratch']
  %s0 = inlined_call_operand.hbm [shape: f32[2,64,256], index: 0, kind: input, shape index: {}]
  %s1 = inlined_call_operand.vmem [shape: f32[4,64], index: 1, kind: input, shape index: {}]
  %s2 = inlined_call_operand.vmem [shape: f32[64,4], index: 2, kind: input, shape index: {}]
  %s3 = inlined_call_operand.hbm [shape: f32[2,64,256], index: 3, kind: output, shape index: {}]
  %s4 = sld [smem:[#allocation0]]
  $region26: #{tpu_custom_call.1} parent=0
    _
  %s6 = ssub.s32 1, %s4
  %s7 = scalar_select 0, %s6, %s4
  $region1: #{tpu_custom_call.1} parent=0
    #allocation2 [shape = 'u8[131072]{0}', space=vmem, size = 0x20000, scoped, tag = 'input window, operand 0, single buffered']
    #allocation3 [shape = 's32[1]{0}', space=sflag, size = 0x4, scoped, tag = 'scoped memory for tpu_custom_call.1']
    #allocation4 [shape = 's32[1]{0}', space=sflag, size = 0x4, scoped, tag = 'scoped memory for tpu_custom_call.1']
    #allocation5 [shape = 'u8[131072]{0}', space=vmem, size = 0x20000, scoped, tag = 'output window, operand 0, single buffered']
    %8 = vsyncpa [#allocation3], 0
    %9 = vsyncpa [#allocation4], 0
    // Predicated region
    $region2: #{tpu_custom_call.1} parent=1 // pred_check
      _
    $region3: #{tpu_custom_call.1} parent=1 // pred_check_branch
      %11 = sbr.rel (0) target = $region5
    $region4: #{tpu_custom_call.1} parent=1 // pred_region
      %13 = vsyncadd [#allocation3], 0
      %s14 = sshll.u32 %s0, 4
      %s15 = int_to_ptr.hbm [resolvable:$true] %s14
      %s16 = sshll.u32 [#allocation2], 4
      %s17 = int_to_ptr.vmem [resolvable:$true] %s16
      %22 = dma.hbm_to_vmem [thread:$0]  %s15, 4096, %s17, [#allocation3], 256, 256, 16
    $region5: #{tpu_custom_call.1} parent=1 // pred_fallthru
      _
    // Predicated region
    $region6: #{tpu_custom_call.1} parent=1 // pred_check
      _
    $region7: #{tpu_custom_call.1} parent=1 // pred_check_branch
      %24 = sbr.rel (0) target = $region9
    $region8: #{tpu_custom_call.1} parent=1 // pred_region
      _
    $region9: #{tpu_custom_call.1} parent=1 // pred_fallthru
      _
    // Predicated region
    $region10: #{tpu_custom_call.1} parent=1 // pred_check
      _
    $region11: #{tpu_custom_call.1} parent=1 // pred_check_branch
      %26 = sbr.rel (0) target = $region13
    $region12: #{tpu_custom_call.1} parent=1 // pred_region
      _
    $region13: #{tpu_custom_call.1} parent=1 // pred_fallthru
      _
    // Predicated region
    $region14: #{tpu_custom_call.1} parent=1 // pred_check
      _
    $region15: #{tpu_custom_call.1} parent=1 // pred_check_branch
      %28 = sbr.rel (0) target = $region17
    $region16: #{tpu_custom_call.1} parent=1 // pred_region
      %30 = dma.done [#allocation3], 4096
    $region17: #{tpu_custom_call.1} parent=1 // pred_fallthru
      _
    %v31 = vld [vmem:[%s1] sm:$0xf]
    %v32 = vld [vmem:[%s2] sm:$0xff]
    %v33 = vld [vmem:[%s2 + $0x8] sm:$0xff]
    %v34 = vld [vmem:[%s2 + $0x10] sm:$0xff]
    %v35 = vld [vmem:[%s2 + $0x18] sm:$0xff]
    %v36 = vld [vmem:[%s2 + $0x20] sm:$0xff]
    %v37 = vld [vmem:[%s2 + $0x28] sm:$0xff]
    %v38 = vld [vmem:[%s2 + $0x30] sm:$0xff]
    %v39 = vld [vmem:[%s2 + $0x38] sm:$0xff]
    %v40 = vld [vmem:[#allocation2] sm:$0xff]
    %v41 = vld [vmem:[#allocation2 + $0x8] sm:$0xff]
    %v42 = vld [vmem:[#allocation2 + $0x10] sm:$0xff]
    %v43 = vld [vmem:[#allocation2 + $0x18] sm:$0xff]
    %v44 = vld [vmem:[#allocation2 + $0x20] sm:$0xff]
    %v45 = vld [vmem:[#allocation2 + $0x28] sm:$0xff]
    %v46 = vld [vmem:[#allocation2 + $0x30] sm:$0xff]
    %v47 = vld [vmem:[#allocation2 + $0x38] sm:$0xff]
    %v48 = vld [vmem:[#allocation2 + $0x40] sm:$0xff]
    %v49 = vld [vmem:[#allocation2 + $0x48] sm:$0xff]
    %v50 = vld [vmem:[#allocation2 + $0x50] sm:$0xff]
    %v51 = vld [vmem:[#allocation2 + $0x58] sm:$0xff]
    %v52 = vld [vmem:[#allocation2 + $0x60] sm:$0xff]
    %v53 = vld [vmem:[#allocation2 + $0x68] sm:$0xff]
    %v54 = vld [vmem:[#allocation2 + $0x70] sm:$0xff]
    %v55 = vld [vmem:[#allocation2 + $0x78] sm:$0xff]
    %v56 = vadd.f32 %v40, %v41
    %57 = vadd.xlane.f32.xlu0 %v56
    %v58 = vpop.xlane.xlu0 %57
    %v59 = vadd.f32 %v42, %v43
    %60 = vadd.xlane.f32.xlu0 %v59
    %v61 = vpop.xlane.xlu0 %60
    %v62 = vadd.f32 %v44, %v45
    %63 = vadd.xlane.f32.xlu0 %v62
    %v64 = vpop.xlane.xlu0 %63
    %v65 = vadd.f32 %v46, %v47
    %66 = vadd.xlane.f32.xlu0 %v65
    %v67 = vpop.xlane.xlu0 %66
    %v68 = vadd.f32 %v48, %v49
    %69 = vadd.xlane.f32.xlu0 %v68
    %v70 = vpop.xlane.xlu0 %69
    %v71 = vadd.f32 %v50, %v51
    %72 = vadd.xlane.f32.xlu0 %v71
    %v73 = vpop.xlane.xlu0 %72
    %v74 = vadd.f32 %v52, %v53
    %75 = vadd.xlane.f32.xlu0 %v74
    %v76 = vpop.xlane.xlu0 %75
    %v77 = vadd.f32 %v54, %v55
    %78 = vadd.xlane.f32.xlu0 %v77
    %v79 = vpop.xlane.xlu0 %78
    %v80 = vmul.f32 %v58, 0.00390625
    %v81 = vmul.f32 %v61, 0.00390625
    %v82 = vmul.f32 %v64, 0.00390625
    %v83 = vmul.f32 %v67, 0.00390625
    %v84 = vmul.f32 %v70, 0.00390625
    %v85 = vmul.f32 %v73, 0.00390625
    %v86 = vmul.f32 %v76, 0.00390625
    %v87 = vmul.f32 %v79, 0.00390625
    %v88 = vmax.f32 %v40, %v41
    %89 = vmax.xlane.f32.xlu0 %v88
    %v90 = vpop.xlane.xlu0 %89
    %v91 = vmax.f32 %v42, %v43
    %92 = vmax.xlane.f32.xlu0 %v91
    %v93 = vpop.xlane.xlu0 %92
    %v94 = vmax.f32 %v44, %v45
    %95 = vmax.xlane.f32.xlu0 %v94
    %v96 = vpop.xlane.xlu0 %95
    %v97 = vmax.f32 %v46, %v47
    %98 = vmax.xlane.f32.xlu0 %v97
    %v99 = vpop.xlane.xlu0 %98
    %v100 = vmax.f32 %v48, %v49
    %101 = vmax.xlane.f32.xlu0 %v100
    %v102 = vpop.xlane.xlu0 %101
    %v103 = vmax.f32 %v50, %v51
    %104 = vmax.xlane.f32.xlu0 %v103
    %v105 = vpop.xlane.xlu0 %104
    %v106 = vmax.f32 %v52, %v53
    %107 = vmax.xlane.f32.xlu0 %v106
    %v108 = vpop.xlane.xlu0 %107
    %v109 = vmax.f32 %v54, %v55
    %110 = vmax.xlane.f32.xlu0 %v109
    %v111 = vpop.xlane.xlu0 %110
    %vm112 = vcmask 7168
    %v113 = vsel %vm112, %v80, %v90
    %v114 = vsel %vm112, %v81, %v93
    %v115 = vsel %vm112, %v82, %v96
    %v116 = vsel %vm112, %v83, %v99
    %v117 = vsel %vm112, %v84, %v102
    %v118 = vsel %vm112, %v85, %v105
    %v119 = vsel %vm112, %v86, %v108
    %v120 = vsel %vm112, %v87, %v111
    %vm121 = vcmask 523264
    %v123 = vsel %vm121, %v31, 0
    %125 = vmatpush.msra.mxu0 0.0
    %126 = vmatpush.msra.mxu0 0.0
    %127 = vmatpush.msra.mxu0 0.0
    %128 = vmatpush.msra.mxu0 0.0
    %129 = vmatpush.msra.mxu0 0.0
    %130 = vmatpush.msra.mxu0 0.0
    %131 = vmatpush.msra.mxu0 0.0
    %132 = vmatpush.msra.mxu0 0.0
    %133 = vmatpush.msra.mxu0 %v120
    %134 = vmatpush.msra.mxu0 %v119
    %135 = vmatpush.msra.mxu0 %v118
    %136 = vmatpush.msra.mxu0 %v117
    %137 = vmatpush.msra.mxu0 %v116
    %138 = vmatpush.msra.mxu0 %v115
    %139 = vmatpush.msra.mxu0 %v114
    %140 = vmatpush.msra.mxu0 %v113
    %141 = vmatmul.f32.gmra.mxu0 %v123
    %v142 = vpop.f32.mrf.mxu0
    %v143 = vadd.f32 0.0, %v142
    %144 = vdwg.mxu0
    %v145 = vmax.f32 %v143, 0.0
    %147 = vrot.lane.b32.xlu0 %v145, 127
    %v148 = vpop.permute.xlu0 %147
    %v150 = vadd.f32 %v145, %v148
    %vm151 = vcmask 31744
    %v153 = vsel %vm151, %v32, 0
    %v156 = vsel %vm151, %v33, 0
    %v159 = vsel %vm151, %v34, 0
    %v162 = vsel %vm151, %v35, 0
    %v165 = vsel %vm151, %v36, 0
    %v168 = vsel %vm151, %v37, 0
    %v171 = vsel %vm151, %v38, 0
    %v174 = vsel %vm151, %v39, 0
    %vm176 = vcmask 1043456
    %v178 = vsel %vm176, %v150, 0
    %180 = vmatpush.msra.mxu0 0.0
    %181 = vmatpush.msra.mxu0 0.0
    %182 = vmatpush.msra.mxu0 0.0
    %183 = vmatpush.msra.mxu0 0.0
    %184 = vmatpush.msra.mxu0 0.0
    %185 = vmatpush.msra.mxu0 0.0
    %186 = vmatpush.msra.mxu0 0.0
    %187 = vmatpush.msra.mxu0 0.0
    %188 = vmatpush.msra.mxu0 0.0
    %189 = vmatpush.msra.mxu0 0.0
    %190 = vmatpush.msra.mxu0 0.0
    %191 = vmatpush.msra.mxu0 0.0
    %192 = vmatpush.msra.mxu0 0.0
    %193 = vmatpush.msra.mxu0 0.0
    %194 = vmatpush.msra.mxu0 0.0
    %195 = vmatpush.msra.mxu0 %v178
    %196 = vmatmul.f32.gmra.mxu0 %v153
    %v197 = vpop.f32.mrf.mxu0
    %v198 = vadd.f32 0.0, %v197
    %199 = vmatmul.f32.gmra.mxu0 %v156
    %v200 = vpop.f32.mrf.mxu0
    %v201 = vadd.f32 0.0, %v200
    %202 = vmatmul.f32.gmra.mxu0 %v159
    %v203 = vpop.f32.mrf.mxu0
    %v204 = vadd.f32 0.0, %v203
    %205 = vmatmul.f32.gmra.mxu0 %v162
    %v206 = vpop.f32.mrf.mxu0
    %v207 = vadd.f32 0.0, %v206
    %208 = vmatmul.f32.gmra.mxu0 %v165
    %v209 = vpop.f32.mrf.mxu0
    %v210 = vadd.f32 0.0, %v209
    %211 = vmatmul.f32.gmra.mxu0 %v168
    %v212 = vpop.f32.mrf.mxu0
    %v213 = vadd.f32 0.0, %v212
    %214 = vmatmul.f32.gmra.mxu0 %v171
    %v215 = vpop.f32.mrf.mxu0
    %v216 = vadd.f32 0.0, %v215
    %217 = vmatmul.f32.gmra.mxu0 %v174
    %v218 = vpop.f32.mrf.mxu0
    %v219 = vadd.f32 0.0, %v218
    %220 = vdwg.mxu0
    %v221 = vxor.u32 %v198, 2147483648
    %v222 = vxor.u32 %v201, 2147483648
    %v223 = vxor.u32 %v204, 2147483648
    %v224 = vxor.u32 %v207, 2147483648
    %v225 = vxor.u32 %v210, 2147483648
    %v226 = vxor.u32 %v213, 2147483648
    %v227 = vxor.u32 %v216, 2147483648
    %v228 = vxor.u32 %v219, 2147483648
    %v229 = vmul.f32 %v221, 1.442695
    %v230 = vpow.pop %v229
    %v231 = vmul.f32 %v222, 1.442695
    %v232 = vpow.pop %v231
    %v233 = vmul.f32 %v223, 1.442695
    %v234 = vpow.pop %v233
    %v235 = vmul.f32 %v224, 1.442695
    %v236 = vpow.pop %v235
    %v237 = vmul.f32 %v225, 1.442695
    %v238 = vpow.pop %v237
    %v239 = vmul.f32 %v226, 1.442695
    %v240 = vpow.pop %v239
    %v241 = vmul.f32 %v227, 1.442695
    %v242 = vpow.pop %v241
    %v243 = vmul.f32 %v228, 1.442695
    %v244 = vpow.pop %v243
    %v245 = vadd.f32 %v230, 1.0
    %v246 = vadd.f32 %v232, 1.0
    %v247 = vadd.f32 %v234, 1.0
    %v248 = vadd.f32 %v236, 1.0
    %v249 = vadd.f32 %v238, 1.0
    %v250 = vadd.f32 %v240, 1.0
    %v251 = vadd.f32 %v242, 1.0
    %v252 = vadd.f32 %v244, 1.0
    %v253 = vrcp.pop %v245
    %v254 = vmul.f32 %v245, %v253
    %v255 = vsub.f32 1.0, %v254
    %v256 = vmul.f32 %v253, %v255
    %v257 = vadd.f32 %v253, %v256
    %vm258 = vweird.f32 %v245
    %vm259 = vweird.f32 %v253
    %vm260 = vmor %vm258, %vm259
    %v261 = vsel %vm260, %v253, %v257
    %v262 = vand.u32 2147483647, %v245
    %vm263 = vcmp.eq.f32.partialorder %v262, 8.507059e+37
    %v264 = vand.u32 %v245, 2147483648
    %v265 = vor.u32 1.1754944e-38, %v264
    %v266 = vsel %vm263, %v265, %v261
    %v267 = vmul.f32 1.0, %v266
    %v268 = vrcp.pop %v246
    %v269 = vmul.f32 %v246, %v268
    %v270 = vsub.f32 1.0, %v269
    %v271 = vmul.f32 %v268, %v270
    %v272 = vadd.f32 %v268, %v271
    %vm273 = vweird.f32 %v246
    %vm274 = vweird.f32 %v268
    %vm275 = vmor %vm273, %vm274
    %v276 = vsel %vm275, %v268, %v272
    %v277 = vand.u32 2147483647, %v246
    %vm278 = vcmp.eq.f32.partialorder %v277, 8.507059e+37
    %v279 = vand.u32 %v246, 2147483648
    %v280 = vor.u32 1.1754944e-38, %v279
    %v281 = vsel %vm278, %v280, %v276
    %v282 = vmul.f32 1.0, %v281
    %v283 = vrcp.pop %v247
    %v284 = vmul.f32 %v247, %v283
    %v285 = vsub.f32 1.0, %v284
    %v286 = vmul.f32 %v283, %v285
    %v287 = vadd.f32 %v283, %v286
    %vm288 = vweird.f32 %v247
    %vm289 = vweird.f32 %v283
    %vm290 = vmor %vm288, %vm289
    %v291 = vsel %vm290, %v283, %v287
    %v292 = vand.u32 2147483647, %v247
    %vm293 = vcmp.eq.f32.partialorder %v292, 8.507059e+37
    %v294 = vand.u32 %v247, 2147483648
    %v295 = vor.u32 1.1754944e-38, %v294
    %v296 = vsel %vm293, %v295, %v291
    %v297 = vmul.f32 1.0, %v296
    %v298 = vrcp.pop %v248
    %v299 = vmul.f32 %v248, %v298
    %v300 = vsub.f32 1.0, %v299
    %v301 = vmul.f32 %v298, %v300
    %v302 = vadd.f32 %v298, %v301
    %vm303 = vweird.f32 %v248
    %vm304 = vweird.f32 %v298
    %vm305 = vmor %vm303, %vm304
    %v306 = vsel %vm305, %v298, %v302
    %v307 = vand.u32 2147483647, %v248
    %vm308 = vcmp.eq.f32.partialorder %v307, 8.507059e+37
    %v309 = vand.u32 %v248, 2147483648
    %v310 = vor.u32 1.1754944e-38, %v309
    %v311 = vsel %vm308, %v310, %v306
    %v312 = vmul.f32 1.0, %v311
    %v313 = vrcp.pop %v249
    %v314 = vmul.f32 %v249, %v313
    %v315 = vsub.f32 1.0, %v314
    %v316 = vmul.f32 %v313, %v315
    %v317 = vadd.f32 %v313, %v316
    %vm318 = vweird.f32 %v249
    %vm319 = vweird.f32 %v313
    %vm320 = vmor %vm318, %vm319
    %v321 = vsel %vm320, %v313, %v317
    %v322 = vand.u32 2147483647, %v249
    %vm323 = vcmp.eq.f32.partialorder %v322, 8.507059e+37
    %v324 = vand.u32 %v249, 2147483648
    %v325 = vor.u32 1.1754944e-38, %v324
    %v326 = vsel %vm323, %v325, %v321
    %v327 = vmul.f32 1.0, %v326
    %v328 = vrcp.pop %v250
    %v329 = vmul.f32 %v250, %v328
    %v330 = vsub.f32 1.0, %v329
    %v331 = vmul.f32 %v328, %v330
    %v332 = vadd.f32 %v328, %v331
    %vm333 = vweird.f32 %v250
    %vm334 = vweird.f32 %v328
    %vm335 = vmor %vm333, %vm334
    %v336 = vsel %vm335, %v328, %v332
    %v337 = vand.u32 2147483647, %v250
    %vm338 = vcmp.eq.f32.partialorder %v337, 8.507059e+37
    %v339 = vand.u32 %v250, 2147483648
    %v340 = vor.u32 1.1754944e-38, %v339
    %v341 = vsel %vm338, %v340, %v336
    %v342 = vmul.f32 1.0, %v341
    %v343 = vrcp.pop %v251
    %v344 = vmul.f32 %v251, %v343
    %v345 = vsub.f32 1.0, %v344
    %v346 = vmul.f32 %v343, %v345
    %v347 = vadd.f32 %v343, %v346
    %vm348 = vweird.f32 %v251
    %vm349 = vweird.f32 %v343
    %vm350 = vmor %vm348, %vm349
    %v351 = vsel %vm350, %v343, %v347
    %v352 = vand.u32 2147483647, %v251
    %vm353 = vcmp.eq.f32.partialorder %v352, 8.507059e+37
    %v354 = vand.u32 %v251, 2147483648
    %v355 = vor.u32 1.1754944e-38, %v354
    %v356 = vsel %vm353, %v355, %v351
    %v357 = vmul.f32 1.0, %v356
    %v358 = vrcp.pop %v252
    %v359 = vmul.f32 %v252, %v358
    %v360 = vsub.f32 1.0, %v359
    %v361 = vmul.f32 %v358, %v360
    %v362 = vadd.f32 %v358, %v361
    %vm363 = vweird.f32 %v252
    %vm364 = vweird.f32 %v358
    %vm365 = vmor %vm363, %vm364
    %v366 = vsel %vm365, %v358, %v362
    %v367 = vand.u32 2147483647, %v252
    %vm368 = vcmp.eq.f32.partialorder %v367, 8.507059e+37
    %v369 = vand.u32 %v252, 2147483648
    %v370 = vor.u32 1.1754944e-38, %v369
    %v371 = vsel %vm368, %v370, %v366
    %v372 = vmul.f32 1.0, %v371
    %374 = vset.pattern.permute.xlu0 0
    %375 = vperm.xlu0 %374, %v267
    %v376 = vpop.permute.xlu0 %375
    %379 = vset.pattern.permute.xlu0 0
    %380 = vperm.xlu0 %379, %v282
    %v381 = vpop.permute.xlu0 %380
    %384 = vset.pattern.permute.xlu0 0
    %385 = vperm.xlu0 %384, %v297
    %v386 = vpop.permute.xlu0 %385
    %389 = vset.pattern.permute.xlu0 0
    %390 = vperm.xlu0 %389, %v312
    %v391 = vpop.permute.xlu0 %390
    %394 = vset.pattern.permute.xlu0 0
    %395 = vperm.xlu0 %394, %v327
    %v396 = vpop.permute.xlu0 %395
    %399 = vset.pattern.permute.xlu0 0
    %400 = vperm.xlu0 %399, %v342
    %v401 = vpop.permute.xlu0 %400
    %404 = vset.pattern.permute.xlu0 0
    %405 = vperm.xlu0 %404, %v357
    %v406 = vpop.permute.xlu0 %405
    %409 = vset.pattern.permute.xlu0 0
    %410 = vperm.xlu0 %409, %v372
    %v411 = vpop.permute.xlu0 %410
    %v413 = vmul.f32 %v40, %v376
    %v414 = vmul.f32 %v41, %v376
    %v415 = vmul.f32 %v42, %v381
    %v416 = vmul.f32 %v43, %v381
    %v417 = vmul.f32 %v44, %v386
    %v418 = vmul.f32 %v45, %v386
    %v419 = vmul.f32 %v46, %v391
    %v420 = vmul.f32 %v47, %v391
    %v421 = vmul.f32 %v48, %v396
    %v422 = vmul.f32 %v49, %v396
    %v423 = vmul.f32 %v50, %v401
    %v424 = vmul.f32 %v51, %v401
    %v425 = vmul.f32 %v52, %v406
    %v426 = vmul.f32 %v53, %v406
    %v427 = vmul.f32 %v54, %v411
    %v428 = vmul.f32 %v55, %v411
    %429 = vst [vmem:[#allocation5] sm:$0xff] %v413
    %430 = vst [vmem:[#allocation5 + $0x8] sm:$0xff] %v414
    %431 = vst [vmem:[#allocation5 + $0x10] sm:$0xff] %v415
    %432 = vst [vmem:[#allocation5 + $0x18] sm:$0xff] %v416
    %433 = vst [vmem:[#allocation5 + $0x20] sm:$0xff] %v417
    %434 = vst [vmem:[#allocation5 + $0x28] sm:$0xff] %v418
    %435 = vst [vmem:[#allocation5 + $0x30] sm:$0xff] %v419
    %436 = vst [vmem:[#allocation5 + $0x38] sm:$0xff] %v420
    %437 = vst [vmem:[#allocation5 + $0x40] sm:$0xff] %v421
    %438 = vst [vmem:[#allocation5 + $0x48] sm:$0xff] %v422
    %439 = vst [vmem:[#allocation5 + $0x50] sm:$0xff] %v423
    %440 = vst [vmem:[#allocation5 + $0x58] sm:$0xff] %v424
    %441 = vst [vmem:[#allocation5 + $0x60] sm:$0xff] %v425
    %442 = vst [vmem:[#allocation5 + $0x68] sm:$0xff] %v426
    %443 = vst [vmem:[#allocation5 + $0x70] sm:$0xff] %v427
    %444 = vst [vmem:[#allocation5 + $0x78] sm:$0xff] %v428
    %s445 = scalar_lea.vmem [#allocation2], 128
    %v446 = vld [vmem:[%s445] sm:$0xff]
    %v447 = vld [vmem:[%s445 + $0x8] sm:$0xff]
    %v448 = vld [vmem:[%s445 + $0x10] sm:$0xff]
    %v449 = vld [vmem:[%s445 + $0x18] sm:$0xff]
    %v450 = vld [vmem:[%s445 + $0x20] sm:$0xff]
    %v451 = vld [vmem:[%s445 + $0x28] sm:$0xff]
    %v452 = vld [vmem:[%s445 + $0x30] sm:$0xff]
    %v453 = vld [vmem:[%s445 + $0x38] sm:$0xff]
    %v454 = vld [vmem:[%s445 + $0x40] sm:$0xff]
    %v455 = vld [vmem:[%s445 + $0x48] sm:$0xff]
    %v456 = vld [vmem:[%s445 + $0x50] sm:$0xff]
    %v457 = vld [vmem:[%s445 + $0x58] sm:$0xff]
    %v458 = vld [vmem:[%s445 + $0x60] sm:$0xff]
    %v459 = vld [vmem:[%s445 + $0x68] sm:$0xff]
    %v460 = vld [vmem:[%s445 + $0x70] sm:$0xff]
    %v461 = vld [vmem:[%s445 + $0x78] sm:$0xff]
    %v462 = vadd.f32 %v446, %v447
    %463 = vadd.xlane.f32.xlu0 %v462
    %v464 = vpop.xlane.xlu0 %463
    %v465 = vadd.f32 %v448, %v449
    %466 = vadd.xlane.f32.xlu0 %v465
    %v467 = vpop.xlane.xlu0 %466
    %v468 = vadd.f32 %v450, %v451
    %469 = vadd.xlane.f32.xlu0 %v468
    %v470 = vpop.xlane.xlu0 %469
    %v471 = vadd.f32 %v452, %v453
    %472 = vadd.xlane.f32.xlu0 %v471
    %v473 = vpop.xlane.xlu0 %472
    %v474 = vadd.f32 %v454, %v455
    %475 = vadd.xlane.f32.xlu0 %v474
    %v476 = vpop.xlane.xlu0 %475
    %v477 = vadd.f32 %v456, %v457
    %478 = vadd.xlane.f32.xlu0 %v477
    %v479 = vpop.xlane.xlu0 %478
    %v480 = vadd.f32 %v458, %v459
    %481 = vadd.xlane.f32.xlu0 %v480
    %v482 = vpop.xlane.xlu0 %481
    %v483 = vadd.f32 %v460, %v461
    %484 = vadd.xlane.f32.xlu0 %v483
    %v485 = vpop.xlane.xlu0 %484
    %v486 = vmul.f32 %v464, 0.00390625
    %v487 = vmul.f32 %v467, 0.00390625
    %v488 = vmul.f32 %v470, 0.00390625
    %v489 = vmul.f32 %v473, 0.00390625
    %v490 = vmul.f32 %v476, 0.00390625
    %v491 = vmul.f32 %v479, 0.00390625
    %v492 = vmul.f32 %v482, 0.00390625
    %v493 = vmul.f32 %v485, 0.00390625
    %v494 = vmax.f32 %v446, %v447
    %495 = vmax.xlane.f32.xlu0 %v494
    %v496 = vpop.xlane.xlu0 %495
    %v497 = vmax.f32 %v448, %v449
    %498 = vmax.xlane.f32.xlu0 %v497
    %v499 = vpop.xlane.xlu0 %498
    %v500 = vmax.f32 %v450, %v451
    %501 = vmax.xlane.f32.xlu0 %v500
    %v502 = vpop.xlane.xlu0 %501
    %v503 = vmax.f32 %v452, %v453
    %504 = vmax.xlane.f32.xlu0 %v503
    %v505 = vpop.xlane.xlu0 %504
    %v506 = vmax.f32 %v454, %v455
    %507 = vmax.xlane.f32.xlu0 %v506
    %v508 = vpop.xlane.xlu0 %507
    %v509 = vmax.f32 %v456, %v457
    %510 = vmax.xlane.f32.xlu0 %v509
    %v511 = vpop.xlane.xlu0 %510
    %v512 = vmax.f32 %v458, %v459
    %513 = vmax.xlane.f32.xlu0 %v512
    %v514 = vpop.xlane.xlu0 %513
    %v515 = vmax.f32 %v460, %v461
    %516 = vmax.xlane.f32.xlu0 %v515
    %v517 = vpop.xlane.xlu0 %516
    %v518 = vsel %vm112, %v486, %v496
    %v519 = vsel %vm112, %v487, %v499
    %v520 = vsel %vm112, %v488, %v502
    %v521 = vsel %vm112, %v489, %v505
    %v522 = vsel %vm112, %v490, %v508
    %v523 = vsel %vm112, %v491, %v511
    %v524 = vsel %vm112, %v492, %v514
    %v525 = vsel %vm112, %v493, %v517
    %526 = vmatpush.msra.mxu0 0.0
    %527 = vmatpush.msra.mxu0 0.0
    %528 = vmatpush.msra.mxu0 0.0
    %529 = vmatpush.msra.mxu0 0.0
    %530 = vmatpush.msra.mxu0 0.0
    %531 = vmatpush.msra.mxu0 0.0
    %532 = vmatpush.msra.mxu0 0.0
    %533 = vmatpush.msra.mxu0 0.0
    %534 = vmatpush.msra.mxu0 %v525
    %535 = vmatpush.msra.mxu0 %v524
    %536 = vmatpush.msra.mxu0 %v523
    %537 = vmatpush.msra.mxu0 %v522
    %538 = vmatpush.msra.mxu0 %v521
    %539 = vmatpush.msra.mxu0 %v520
    %540 = vmatpush.msra.mxu0 %v519
    %541 = vmatpush.msra.mxu0 %v518
    %542 = vmatmul.f32.gmra.mxu0 %v123
    %v543 = vpop.f32.mrf.mxu0
    %v544 = vadd.f32 0.0, %v543
    %545 = vdwg.mxu0
    %v546 = vmax.f32 %v544, 0.0
    %548 = vrot.lane.b32.xlu0 %v546, 127
    %v549 = vpop.permute.xlu0 %548
    %v551 = vadd.f32 %v546, %v549
    %v553 = vsel %vm176, %v551, 0
    %555 = vmatpush.msra.mxu0 0.0
    %556 = vmatpush.msra.mxu0 0.0
    %557 = vmatpush.msra.mxu0 0.0
    %558 = vmatpush.msra.mxu0 0.0
    %559 = vmatpush.msra.mxu0 0.0
    %560 = vmatpush.msra.mxu0 0.0
    %561 = vmatpush.msra.mxu0 0.0
    %562 = vmatpush.msra.mxu0 0.0
    %563 = vmatpush.msra.mxu0 0.0
    %564 = vmatpush.msra.mxu0 0.0
    %565 = vmatpush.msra.mxu0 0.0
    %566 = vmatpush.msra.mxu0 0.0
    %567 = vmatpush.msra.mxu0 0.0
    %568 = vmatpush.msra.mxu0 0.0
    %569 = vmatpush.msra.mxu0 0.0
    %570 = vmatpush.msra.mxu0 %v553
    %571 = vmatmul.f32.gmra.mxu0 %v153
    %v572 = vpop.f32.mrf.mxu0
    %v573 = vadd.f32 0.0, %v572
    %574 = vmatmul.f32.gmra.mxu0 %v156
    %v575 = vpop.f32.mrf.mxu0
    %v576 = vadd.f32 0.0, %v575
    %577 = vmatmul.f32.gmra.mxu0 %v159
    %v578 = vpop.f32.mrf.mxu0
    %v579 = vadd.f32 0.0, %v578
    %580 = vmatmul.f32.gmra.mxu0 %v162
    %v581 = vpop.f32.mrf.mxu0
    %v582 = vadd.f32 0.0, %v581
    %583 = vmatmul.f32.gmra.mxu0 %v165
    %v584 = vpop.f32.mrf.mxu0
    %v585 = vadd.f32 0.0, %v584
    %586 = vmatmul.f32.gmra.mxu0 %v168
    %v587 = vpop.f32.mrf.mxu0
    %v588 = vadd.f32 0.0, %v587
    %589 = vmatmul.f32.gmra.mxu0 %v171
    %v590 = vpop.f32.mrf.mxu0
    %v591 = vadd.f32 0.0, %v590
    %592 = vmatmul.f32.gmra.mxu0 %v174
    %v593 = vpop.f32.mrf.mxu0
    %v594 = vadd.f32 0.0, %v593
    %595 = vdwg.mxu0
    %v596 = vxor.u32 %v573, 2147483648
    %v597 = vxor.u32 %v576, 2147483648
    %v598 = vxor.u32 %v579, 2147483648
    %v599 = vxor.u32 %v582, 2147483648
    %v600 = vxor.u32 %v585, 2147483648
    %v601 = vxor.u32 %v588, 2147483648
    %v602 = vxor.u32 %v591, 2147483648
    %v603 = vxor.u32 %v594, 2147483648
    %v604 = vmul.f32 %v596, 1.442695
    %v605 = vpow.pop %v604
    %v606 = vmul.f32 %v597, 1.442695
    %v607 = vpow.pop %v606
    %v608 = vmul.f32 %v598, 1.442695
    %v609 = vpow.pop %v608
    %v610 = vmul.f32 %v599, 1.442695
    %v611 = vpow.pop %v610
    %v612 = vmul.f32 %v600, 1.442695
    %v613 = vpow.pop %v612
    %v614 = vmul.f32 %v601, 1.442695
    %v615 = vpow.pop %v614
    %v616 = vmul.f32 %v602, 1.442695
    %v617 = vpow.pop %v616
    %v618 = vmul.f32 %v603, 1.442695
    %v619 = vpow.pop %v618
    %v620 = vadd.f32 %v605, 1.0
    %v621 = vadd.f32 %v607, 1.0
    %v622 = vadd.f32 %v609, 1.0
    %v623 = vadd.f32 %v611, 1.0
    %v624 = vadd.f32 %v613, 1.0
    %v625 = vadd.f32 %v615, 1.0
    %v626 = vadd.f32 %v617, 1.0
    %v627 = vadd.f32 %v619, 1.0
    %v628 = vrcp.pop %v620
    %v629 = vmul.f32 %v620, %v628
    %v630 = vsub.f32 1.0, %v629
    %v631 = vmul.f32 %v628, %v630
    %v632 = vadd.f32 %v628, %v631
    %vm633 = vweird.f32 %v620
    %vm634 = vweird.f32 %v628
    %vm635 = vmor %vm633, %vm634
    %v636 = vsel %vm635, %v628, %v632
    %v637 = vand.u32 2147483647, %v620
    %vm638 = vcmp.eq.f32.partialorder %v637, 8.507059e+37
    %v639 = vand.u32 %v620, 2147483648
    %v640 = vor.u32 1.1754944e-38, %v639
    %v641 = vsel %vm638, %v640, %v636
    %v642 = vmul.f32 1.0, %v641
    %v643 = vrcp.pop %v621
    %v644 = vmul.f32 %v621, %v643
    %v645 = vsub.f32 1.0, %v644
    %v646 = vmul.f32 %v643, %v645
    %v647 = vadd.f32 %v643, %v646
    %vm648 = vweird.f32 %v621
    %vm649 = vweird.f32 %v643
    %vm650 = vmor %vm648, %vm649
    %v651 = vsel %vm650, %v643, %v647
    %v652 = vand.u32 2147483647, %v621
    %vm653 = vcmp.eq.f32.partialorder %v652, 8.507059e+37
    %v654 = vand.u32 %v621, 2147483648
    %v655 = vor.u32 1.1754944e-38, %v654
    %v656 = vsel %vm653, %v655, %v651
    %v657 = vmul.f32 1.0, %v656
    %v658 = vrcp.pop %v622
    %v659 = vmul.f32 %v622, %v658
    %v660 = vsub.f32 1.0, %v659
    %v661 = vmul.f32 %v658, %v660
    %v662 = vadd.f32 %v658, %v661
    %vm663 = vweird.f32 %v622
    %vm664 = vweird.f32 %v658
    %vm665 = vmor %vm663, %vm664
    %v666 = vsel %vm665, %v658, %v662
    %v667 = vand.u32 2147483647, %v622
    %vm668 = vcmp.eq.f32.partialorder %v667, 8.507059e+37
    %v669 = vand.u32 %v622, 2147483648
    %v670 = vor.u32 1.1754944e-38, %v669
    %v671 = vsel %vm668, %v670, %v666
    %v672 = vmul.f32 1.0, %v671
    %v673 = vrcp.pop %v623
    %v674 = vmul.f32 %v623, %v673
    %v675 = vsub.f32 1.0, %v674
    %v676 = vmul.f32 %v673, %v675
    %v677 = vadd.f32 %v673, %v676
    %vm678 = vweird.f32 %v623
    %vm679 = vweird.f32 %v673
    %vm680 = vmor %vm678, %vm679
    %v681 = vsel %vm680, %v673, %v677
    %v682 = vand.u32 2147483647, %v623
    %vm683 = vcmp.eq.f32.partialorder %v682, 8.507059e+37
    %v684 = vand.u32 %v623, 2147483648
    %v685 = vor.u32 1.1754944e-38, %v684
    %v686 = vsel %vm683, %v685, %v681
    %v687 = vmul.f32 1.0, %v686
    %v688 = vrcp.pop %v624
    %v689 = vmul.f32 %v624, %v688
    %v690 = vsub.f32 1.0, %v689
    %v691 = vmul.f32 %v688, %v690
    %v692 = vadd.f32 %v688, %v691
    %vm693 = vweird.f32 %v624
    %vm694 = vweird.f32 %v688
    %vm695 = vmor %vm693, %vm694
    %v696 = vsel %vm695, %v688, %v692
    %v697 = vand.u32 2147483647, %v624
    %vm698 = vcmp.eq.f32.partialorder %v697, 8.507059e+37
    %v699 = vand.u32 %v624, 2147483648
    %v700 = vor.u32 1.1754944e-38, %v699
    %v701 = vsel %vm698, %v700, %v696
    %v702 = vmul.f32 1.0, %v701
    %v703 = vrcp.pop %v625
    %v704 = vmul.f32 %v625, %v703
    %v705 = vsub.f32 1.0, %v704
    %v706 = vmul.f32 %v703, %v705
    %v707 = vadd.f32 %v703, %v706
    %vm708 = vweird.f32 %v625
    %vm709 = vweird.f32 %v703
    %vm710 = vmor %vm708, %vm709
    %v711 = vsel %vm710, %v703, %v707
    %v712 = vand.u32 2147483647, %v625
    %vm713 = vcmp.eq.f32.partialorder %v712, 8.507059e+37
    %v714 = vand.u32 %v625, 2147483648
    %v715 = vor.u32 1.1754944e-38, %v714
    %v716 = vsel %vm713, %v715, %v711
    %v717 = vmul.f32 1.0, %v716
    %v718 = vrcp.pop %v626
    %v719 = vmul.f32 %v626, %v718
    %v720 = vsub.f32 1.0, %v719
    %v721 = vmul.f32 %v718, %v720
    %v722 = vadd.f32 %v718, %v721
    %vm723 = vweird.f32 %v626
    %vm724 = vweird.f32 %v718
    %vm725 = vmor %vm723, %vm724
    %v726 = vsel %vm725, %v718, %v722
    %v727 = vand.u32 2147483647, %v626
    %vm728 = vcmp.eq.f32.partialorder %v727, 8.507059e+37
    %v729 = vand.u32 %v626, 2147483648
    %v730 = vor.u32 1.1754944e-38, %v729
    %v731 = vsel %vm728, %v730, %v726
    %v732 = vmul.f32 1.0, %v731
    %v733 = vrcp.pop %v627
    %v734 = vmul.f32 %v627, %v733
    %v735 = vsub.f32 1.0, %v734
    %v736 = vmul.f32 %v733, %v735
    %v737 = vadd.f32 %v733, %v736
    %vm738 = vweird.f32 %v627
    %vm739 = vweird.f32 %v733
    %vm740 = vmor %vm738, %vm739
    %v741 = vsel %vm740, %v733, %v737
    %v742 = vand.u32 2147483647, %v627
    %vm743 = vcmp.eq.f32.partialorder %v742, 8.507059e+37
    %v744 = vand.u32 %v627, 2147483648
    %v745 = vor.u32 1.1754944e-38, %v744
    %v746 = vsel %vm743, %v745, %v741
    %v747 = vmul.f32 1.0, %v746
    %749 = vset.pattern.permute.xlu0 0
    %750 = vperm.xlu0 %749, %v642
    %v751 = vpop.permute.xlu0 %750
    %754 = vset.pattern.permute.xlu0 0
    %755 = vperm.xlu0 %754, %v657
    %v756 = vpop.permute.xlu0 %755
    %759 = vset.pattern.permute.xlu0 0
    %760 = vperm.xlu0 %759, %v672
    %v761 = vpop.permute.xlu0 %760
    %764 = vset.pattern.permute.xlu0 0
    %765 = vperm.xlu0 %764, %v687
    %v766 = vpop.permute.xlu0 %765
    %769 = vset.pattern.permute.xlu0 0
    %770 = vperm.xlu0 %769, %v702
    %v771 = vpop.permute.xlu0 %770
    %774 = vset.pattern.permute.xlu0 0
    %775 = vperm.xlu0 %774, %v717
    %v776 = vpop.permute.xlu0 %775
    %779 = vset.pattern.permute.xlu0 0
    %780 = vperm.xlu0 %779, %v732
    %v781 = vpop.permute.xlu0 %780
    %784 = vset.pattern.permute.xlu0 0
    %785 = vperm.xlu0 %784, %v747
    %v786 = vpop.permute.xlu0 %785
    %v788 = vmul.f32 %v446, %v751
    %v789 = vmul.f32 %v447, %v751
    %v790 = vmul.f32 %v448, %v756
    %v791 = vmul.f32 %v449, %v756
    %v792 = vmul.f32 %v450, %v761
    %v793 = vmul.f32 %v451, %v761
    %v794 = vmul.f32 %v452, %v766
    %v795 = vmul.f32 %v453, %v766
    %v796 = vmul.f32 %v454, %v771
    %v797 = vmul.f32 %v455, %v771
    %v798 = vmul.f32 %v456, %v776
    %v799 = vmul.f32 %v457, %v776
    %v800 = vmul.f32 %v458, %v781
    %v801 = vmul.f32 %v459, %v781
    %v802 = vmul.f32 %v460, %v786
    %v803 = vmul.f32 %v461, %v786
    %s804 = scalar_lea.vmem [#allocation5], 128
    %805 = vst [vmem:[%s804] sm:$0xff] %v788
    %806 = vst [vmem:[%s804 + $0x8] sm:$0xff] %v789
    %807 = vst [vmem:[%s804 + $0x10] sm:$0xff] %v790
    %808 = vst [vmem:[%s804 + $0x18] sm:$0xff] %v791
    %809 = vst [vmem:[%s804 + $0x20] sm:$0xff] %v792
    %810 = vst [vmem:[%s804 + $0x28] sm:$0xff] %v793
    %811 = vst [vmem:[%s804 + $0x30] sm:$0xff] %v794
    %812 = vst [vmem:[%s804 + $0x38] sm:$0xff] %v795
    %813 = vst [vmem:[%s804 + $0x40] sm:$0xff] %v796
    %814 = vst [vmem:[%s804 + $0x48] sm:$0xff] %v797
    %815 = vst [vmem:[%s804 + $0x50] sm:$0xff] %v798
    %816 = vst [vmem:[%s804 + $0x58] sm:$0xff] %v799
    %817 = vst [vmem:[%s804 + $0x60] sm:$0xff] %v800
    %818 = vst [vmem:[%s804 + $0x68] sm:$0xff] %v801
    %819 = vst [vmem:[%s804 + $0x70] sm:$0xff] %v802
    %820 = vst [vmem:[%s804 + $0x78] sm:$0xff] %v803
    // Predicated region
    $region18: #{tpu_custom_call.1} parent=1 // pred_check
      _
    $region19: #{tpu_custom_call.1} parent=1 // pred_check_branch
      %822 = sbr.rel (0) target = $region21
    $region20: #{tpu_custom_call.1} parent=1 // pred_region
      %824 = vsyncadd [#allocation4], 0
      %s825 = sshll.u32 [#allocation5], 4
      %s826 = int_to_ptr.vmem [resolvable:$true] %s825
      %s827 = sshll.u32 %s3, 4
      %s828 = int_to_ptr.hbm [resolvable:$true] %s827
      %833 = dma.vmem_to_hbm [thread:$0]  %s826, 4096, %s828, [#allocation4], 256, 256, 16
    $region21: #{tpu_custom_call.1} parent=1 // pred_fallthru
      _
    // Predicated region
    $region22: #{tpu_custom_call.1} parent=1 // pred_check
      _
    $region23: #{tpu_custom_call.1} parent=1 // pred_check_branch
      %835 = sbr.rel (0) target = $region25
    $region24: #{tpu_custom_call.1} parent=1 // pred_region
      %837 = dma.done [#allocation4], 4096
    $region25: #{tpu_custom_call.1} parent=1 // pred_fallthru
      _
    %838 = vsyncpa [#allocation3], 1
    %839 = vsyncpa [#allocation4], 1

</llo_original>
